<compile_context>
chip_gen: v5e
topology: v5e:2x2
jax: 0.10.0
libtpu: 0.0.40
codegen_flags: <defaults>
</compile_context>

<pallas_src>
import jax
import jax.numpy as jnp
from jax.experimental import pallas as pl
from jax.experimental.pallas import tpu as pltpu


def _cdiv(a, b):
    return (a + b - 1) // b


def _round_up(n, m):
    return ((n + m - 1) // m) * m


def decoder_kernel(x_ref, w1_ref, b1_ref, w2_ref, b2_ref, w3_ref, b3_ref, o_ref):
    # Cast x to the MXU compute dtype inside the kernel (saves a wrapper-side HBM pass).
    x = x_ref[...].astype(w1_ref.dtype)
    # Layer 1: bf16 MXU matmul, f32 accumulate, f32 bias + ReLU.
    h = jnp.dot(x, w1_ref[...], preferred_element_type=jnp.float32)
    h = jnp.maximum(h + b1_ref[...], 0.0)
    # Layer 2.
    h = jnp.dot(h.astype(w2_ref.dtype), w2_ref[...], preferred_element_type=jnp.float32)
    h = jnp.maximum(h + b2_ref[...], 0.0)
    # Layer 3: Linear only (out_act_fn=None). Output block is (tm, out_dim) unpadded.
    h = jnp.dot(h.astype(w3_ref.dtype), w3_ref[...], preferred_element_type=jnp.float32)
    o_ref[...] = (h + b3_ref[...]).astype(o_ref.dtype)


def decoder_forward(x, params, *, block_m=4096, compute_dtype=jnp.bfloat16,
                    min_pallas_rows=256, vmem_budget_bytes=24 * 1024 * 1024):
    """x: (B, input_dim) float32. params: dict of w1,b1,w2,b2,w3,b3 (weights as (in, out))."""
    w1, b1 = params["w1"], params["b1"]
    w2, b2 = params["w2"], params["b2"]
    w3, b3 = params["w3"], params["b3"]

    B, in_dim = x.shape
    h1 = w1.shape[1]
    h2 = w2.shape[1]
    out_dim = w3.shape[1]

    # Tiny-batch fast path: pallas_call launch + pad/slice overhead dominates; XLA
    # fuses the 3-layer MLP fine at these sizes.
    if B < min_pallas_rows:
        return decoder_ref(x, params)

    x_bytes = jnp.dtype(x.dtype).itemsize
    out_bytes = jnp.dtype(x.dtype).itemsize

    # --- VMEM-derived cap on rows per tile (keeps resident weights + double-buffered
    # x/out + f32 intermediates within budget; matters on v7x's 64 MiB VMEM). ---
    weight_bytes = (in_dim * h1 + h1 * h2 + h2 * out_dim) * 2 + (h1 + h2 + out_dim) * 4
    per_row_bytes = (
        2 * in_dim * x_bytes          # double-buffered x tile (f32 in HBM/VMEM)
        + in_dim * 2                  # in-kernel bf16 copy of x
        + (h1 + h2) * 4               # f32 intermediates
        + (h1 + h2) * 2               # bf16 casts feeding layers 2/3
        + 2 * out_dim * out_bytes     # double-buffered output tile
    )
    vmem_tm_cap = max((vmem_budget_bytes - weight_bytes) // max(per_row_bytes, 1), 8)

    # --- Choose rows-per-tile cap: user block_m, VMEM cap, and (for v7x megacore)
    # at most half the batch when B is mid/large so >=2 grid steps exist. ---
    tm_cap = min(block_m, vmem_tm_cap)
    if B >= 1024:
        tm_cap = min(tm_cap, _round_up(_cdiv(B, 2), 8))
    tm_cap = max((tm_cap // 8) * 8, 8)

    # --- Balanced tiling: pad at most 8*n_tiles rows total. ---
    n_tiles = _cdiv(B, tm_cap)
    tm = _round_up(_cdiv(B, n_tiles), 8)
    B_pad = n_tiles * tm

    xp = x if B_pad == B else jnp.pad(x, ((0, B_pad - B), (0, 0)))

    # Weights to bf16 once (tiny, VMEM-resident across all grid steps); biases stay f32.
    w1c = w1.astype(compute_dtype)
    w2c = w2.astype(compute_dtype)
    w3c = w3.astype(compute_dtype)
    b1_2d = b1.reshape(1, -1).astype(jnp.float32)
    b2_2d = b2.reshape(1, -1).astype(jnp.float32)
    b3_2d = b3.reshape(1, -1).astype(jnp.float32)

    # Weights/biases: same (0, 0) block every grid step -> stay resident in VMEM.
    def resident(a):
        return pl.BlockSpec(a.shape, lambda i: (0,) * a.ndim)

    flops = 2 * B_pad * (in_dim * h1 + h1 * h2 + h2 * out_dim)
    bytes_accessed = (
        B_pad * in_dim * x_bytes
        + B_pad * out_dim * out_bytes
        + (w1c.size + w2c.size + w3c.size) * 2
        + (b1_2d.size + b2_2d.size + b3_2d.size) * 4
    )

    out = pl.pallas_call(
        decoder_kernel,
        out_shape=jax.ShapeDtypeStruct((B_pad, out_dim), x.dtype),
        grid_spec=pltpu.PrefetchScalarGridSpec(
            num_scalar_prefetch=0,
            grid=(n_tiles,),
            in_specs=[
                pl.BlockSpec((tm, in_dim), lambda i: (i, 0)),
                resident(w1c), resident(b1_2d),
                resident(w2c), resident(b2_2d),
                resident(w3c), resident(b3_2d),
            ],
            # out_dim equals the full array dim -> (8,128) divisibility not required;
            # avoids the 8x padded-store inflation and the column slice-back.
            out_specs=pl.BlockSpec((tm, out_dim), lambda i: (i, 0)),
        ),
        compiler_params=pltpu.CompilerParams(
            dimension_semantics=("parallel",),   # shards batch tiles across TCs on v7x
        ),
        cost_estimate=pl.CostEstimate(
            flops=flops, transcendentals=0, bytes_accessed=bytes_accessed
        ),
    )(xp, w1c, b1_2d, w2c, b2_2d, w3c, b3_2d)

    return out if B_pad == B else out[:B]


def init_decoder_params(key, input_dim, out_dim, hidden_dims=(128, 128)):
    """Deterministic synthetic init (PyTorch-like uniform ranges). Weights stored (in, out)."""
    layer_dims = [input_dim] + list(hidden_dims) + [out_dim]
    params = {}
    for i in range(len(layer_dims) - 1):
        fan_in, fan_out = layer_dims[i], layer_dims[i + 1]
        key, kw, kb = jax.random.split(key, 3)
        bound = 1.0 / jnp.sqrt(fan_in)
        w = jax.random.uniform(kw, (fan_in, fan_out), jnp.float32, -bound, bound)
        b = jax.random.uniform(kb, (fan_out,), jnp.float32, -bound, bound)
        params[f"w{i+1}"] = w
        params[f"b{i+1}"] = b
    return params


def decoder_ref(x, params):
    """Pure-JAX f32 reference matching the PyTorch forward."""
    h = jnp.maximum(x @ params["w1"] + params["b1"], 0.0)
    h = jnp.maximum(h @ params["w2"] + params["b2"], 0.0)
    return h @ params["w3"] + params["b3"]


if __name__ == "__main__":
    key = jax.random.PRNGKey(0)
    input_dim, out_dim = 32, 16
    params = init_decoder_params(key, input_dim, out_dim, hidden_dims=(128, 128))

    # Case 1: tiny batch — force the Pallas path (min_pallas_rows=0) to exercise the kernel.
    key, kx = jax.random.split(key)
    x_small = jax.random.normal(kx, (8, input_dim), jnp.float32)
    out_small = jax.block_until_ready(
        decoder_forward(x_small, params, min_pallas_rows=0)
    )
    ref_small = decoder_ref(x_small, params)
    assert out_small.shape == (8, out_dim), out_small.shape
    assert jnp.allclose(out_small, ref_small, atol=5e-2, rtol=5e-2), float(
        jnp.max(jnp.abs(out_small - ref_small)))

    # Case 2: non-multiple-of-8 batch — exercises balanced tiling + row padding + slice-back.
    key, kx = jax.random.split(key)
    x_med = jax.random.normal(kx, (300, input_dim), jnp.float32)
    out_med = jax.block_until_ready(decoder_forward(x_med, params, min_pallas_rows=0))
    ref_med = decoder_ref(x_med, params)
    assert out_med.shape == (300, out_dim), out_med.shape
    assert jnp.allclose(out_med, ref_med, atol=5e-2, rtol=5e-2), float(
        jnp.max(jnp.abs(out_med - ref_med)))

    print("KERNEL_OK")
</pallas_src>

<mosaic_0001>
module attributes {stable_mosaic.version = 11 : i64} {
  func.func @decoder_kernel(%arg0: i32, %arg1: memref<8x32xf32, #tpu.memory_space<vmem>>, %arg2: memref<32x128xbf16, #tpu.memory_space<vmem>>, %arg3: memref<1x128xf32, #tpu.memory_space<vmem>>, %arg4: memref<128x128xbf16, #tpu.memory_space<vmem>>, %arg5: memref<1x128xf32, #tpu.memory_space<vmem>>, %arg6: memref<128x16xbf16, #tpu.memory_space<vmem>>, %arg7: memref<1x16xf32, #tpu.memory_space<vmem>>, %arg8: memref<8x16xf32, #tpu.memory_space<vmem>>) attributes {dimension_semantics = [#tpu.dimension_semantics<parallel>], iteration_bounds = array<i64: 1>, scalar_prefetch = 0 : i64, scratch_operands = 0 : i64, tpu.core_type = #tpu.core_type<tc>, window_params = [{transform_indices = @transform_0, window_bounds = array<i64: 8, 32>}, {pipeline_mode = #tpu.pipeline_mode<synchronous>, transform_indices = @transform_1, window_bounds = array<i64: 32, 128>}, {pipeline_mode = #tpu.pipeline_mode<synchronous>, transform_indices = @transform_2, window_bounds = array<i64: 1, 128>}, {pipeline_mode = #tpu.pipeline_mode<synchronous>, transform_indices = @transform_3, window_bounds = array<i64: 128, 128>}, {pipeline_mode = #tpu.pipeline_mode<synchronous>, transform_indices = @transform_4, window_bounds = array<i64: 1, 128>}, {pipeline_mode = #tpu.pipeline_mode<synchronous>, transform_indices = @transform_5, window_bounds = array<i64: 128, 16>}, {pipeline_mode = #tpu.pipeline_mode<synchronous>, transform_indices = @transform_6, window_bounds = array<i64: 1, 16>}, {transform_indices = @transform_7, window_bounds = array<i64: 8, 16>}]} {
    %c0 = arith.constant 0 : index
    %c0_0 = arith.constant 0 : index
    %0 = vector.load %arg1[%c0, %c0_0] : memref<8x32xf32, #tpu.memory_space<vmem>>, vector<8x32xf32>
    %1 = arith.truncf %0 : vector<8x32xf32> to vector<8x32xbf16>
    %c0_1 = arith.constant 0 : index
    %c0_2 = arith.constant 0 : index
    %2 = vector.load %arg2[%c0_1, %c0_2] : memref<32x128xbf16, #tpu.memory_space<vmem>>, vector<32x128xbf16>
    %cst = arith.constant dense<0.000000e+00> : vector<8x128xf32>
    %3 = tpu.matmul %1, %2, %cst {dimension_numbers = #tpu.dot_dimension_numbers<[1], [0], [0], [1], [0, 0, 1, 1], [], []>} : vector<8x32xbf16>, vector<32x128xbf16>, vector<8x128xf32> -> vector<8x128xf32>
    %c0_3 = arith.constant 0 : index
    %c0_4 = arith.constant 0 : index
    %4 = vector.load %arg3[%c0_3, %c0_4] : memref<1x128xf32, #tpu.memory_space<vmem>>, vector<1x128xf32>
    %5 = vector.broadcast %4 : vector<1x128xf32> to vector<8x128xf32>
    %6 = arith.addf %3, %5 : vector<8x128xf32>
    %cst_5 = arith.constant 0.000000e+00 : f32
    %7 = vector.broadcast %cst_5 : f32 to vector<8x128xf32>
    %8 = arith.maximumf %6, %7 : vector<8x128xf32>
    %9 = arith.truncf %8 : vector<8x128xf32> to vector<8x128xbf16>
    %c0_6 = arith.constant 0 : index
    %c0_7 = arith.constant 0 : index
    %10 = vector.load %arg4[%c0_6, %c0_7] : memref<128x128xbf16, #tpu.memory_space<vmem>>, vector<128x128xbf16>
    %cst_8 = arith.constant dense<0.000000e+00> : vector<8x128xf32>
    %11 = tpu.matmul %9, %10, %cst_8 {dimension_numbers = #tpu.dot_dimension_numbers<[1], [0], [0], [1], [0, 0, 1, 1], [], []>} : vector<8x128xbf16>, vector<128x128xbf16>, vector<8x128xf32> -> vector<8x128xf32>
    %c0_9 = arith.constant 0 : index
    %c0_10 = arith.constant 0 : index
    %12 = vector.load %arg5[%c0_9, %c0_10] : memref<1x128xf32, #tpu.memory_space<vmem>>, vector<1x128xf32>
    %13 = vector.broadcast %12 : vector<1x128xf32> to vector<8x128xf32>
    %14 = arith.addf %11, %13 : vector<8x128xf32>
    %cst_11 = arith.constant 0.000000e+00 : f32
    %15 = vector.broadcast %cst_11 : f32 to vector<8x128xf32>
    %16 = arith.maximumf %14, %15 : vector<8x128xf32>
    %17 = arith.truncf %16 : vector<8x128xf32> to vector<8x128xbf16>
    %c0_12 = arith.constant 0 : index
    %c0_13 = arith.constant 0 : index
    %18 = vector.load %arg6[%c0_12, %c0_13] : memref<128x16xbf16, #tpu.memory_space<vmem>>, vector<128x16xbf16>
    %cst_14 = arith.constant dense<0.000000e+00> : vector<8x16xf32>
    %19 = tpu.matmul %17, %18, %cst_14 {dimension_numbers = #tpu.dot_dimension_numbers<[1], [0], [0], [1], [0, 0, 1, 1], [], []>} : vector<8x128xbf16>, vector<128x16xbf16>, vector<8x16xf32> -> vector<8x16xf32>
    %c0_15 = arith.constant 0 : index
    %c0_16 = arith.constant 0 : index
    %20 = vector.load %arg7[%c0_15, %c0_16] : memref<1x16xf32, #tpu.memory_space<vmem>>, vector<1x16xf32>
    %21 = vector.broadcast %20 : vector<1x16xf32> to vector<8x16xf32>
    %22 = arith.addf %19, %21 : vector<8x16xf32>
    %c0_17 = arith.constant 0 : index
    %c0_18 = arith.constant 0 : index
    %23 = vector.load %arg8[%c0_17, %c0_18] : memref<8x16xf32, #tpu.memory_space<vmem>>, vector<8x16xf32>
    tpu.vector_store %arg8[%c0_17, %c0_18], %22 {strides = array<i32>} : memref<8x16xf32, #tpu.memory_space<vmem>>, vector<8x16xf32>,
    return
  }
  func.func @transform_0(%arg0: i32) -> (i32, i32) {
    %c0_i32 = arith.constant 0 : i32
    %c0_i32_0 = arith.constant 0 : i32
    return %arg0, %c0_i32 : i32, i32
  }
  func.func @transform_1(%arg0: i32) -> (i32, i32) {
    %c0_i32 = arith.constant 0 : i32
    %c0_i32_0 = arith.constant 0 : i32
    %c0_i32_1 = arith.constant 0 : i32
    return %c0_i32, %c0_i32_0 : i32, i32
  }
  func.func @transform_2(%arg0: i32) -> (i32, i32) {
    %c0_i32 = arith.constant 0 : i32
    %c0_i32_0 = arith.constant 0 : i32
    %c0_i32_1 = arith.constant 0 : i32
    return %c0_i32, %c0_i32_0 : i32, i32
  }
  func.func @transform_3(%arg0: i32) -> (i32, i32) {
    %c0_i32 = arith.constant 0 : i32
    %c0_i32_0 = arith.constant 0 : i32
    %c0_i32_1 = arith.constant 0 : i32
    return %c0_i32, %c0_i32_0 : i32, i32
  }
  func.func @transform_4(%arg0: i32) -> (i32, i32) {
    %c0_i32 = arith.constant 0 : i32
    %c0_i32_0 = arith.constant 0 : i32
    %c0_i32_1 = arith.constant 0 : i32
    return %c0_i32, %c0_i32_0 : i32, i32
  }
  func.func @transform_5(%arg0: i32) -> (i32, i32) {
    %c0_i32 = arith.constant 0 : i32
    %c0_i32_0 = arith.constant 0 : i32
    %c0_i32_1 = arith.constant 0 : i32
    return %c0_i32, %c0_i32_0 : i32, i32
  }
  func.func @transform_6(%arg0: i32) -> (i32, i32) {
    %c0_i32 = arith.constant 0 : i32
    %c0_i32_0 = arith.constant 0 : i32
    %c0_i32_1 = arith.constant 0 : i32
    return %c0_i32, %c0_i32_0 : i32, i32
  }
  func.func @transform_7(%arg0: i32) -> (i32, i32) {
    %c0_i32 = arith.constant 0 : i32
    %c0_i32_0 = arith.constant 0 : i32
    return %arg0, %c0_i32 : i32, i32
  }
}

</mosaic_0001>

<llo_original>
// kernel: tpu_custom_call.1
$region0: #{tpu_custom_call.1}
  #allocation0 [shape = 'u32[]', space=smem, size = 0x4, offset = 0x4, fixed_abs, tag = 'smem constant byte address 0x4 - core index']
  #allocation1 [shape = 'u32[72,128]{1,0:T(1,128)}', space=vmem, size = 0x9000, scoped, tag = 'internal scratch']
  %s0 = inlined_call_operand.vmem [shape: f32[8,32], index: 0, kind: input, shape index: {}]
  %s1 = inlined_call_operand.hbm [shape: bf16[32,128], index: 1, kind: input, shape index: {}]
  %s2 = inlined_call_operand.vmem [shape: f32[1,128], index: 2, kind: input, shape index: {}]
  %s3 = inlined_call_operand.vmem [shape: bf16[128,128], index: 3, kind: input, shape index: {}]
  %s4 = inlined_call_operand.vmem [shape: f32[1,128], index: 4, kind: input, shape index: {}]
  %s5 = inlined_call_operand.vmem [shape: bf16[128,16], index: 5, kind: input, shape index: {}]
  %s6 = inlined_call_operand.vmem [shape: f32[1,16], index: 6, kind: input, shape index: {}]
  %s7 = inlined_call_operand.hbm [shape: f32[8,16], index: 7, kind: output, shape index: {}]
  %s8 = sld [smem:[#allocation0]]
  $region42: #{tpu_custom_call.1} parent=0
    _
  %s10 = ssub.s32 1, %s8
  %s11 = scalar_select 0, %s10, %s8
  $region1: #{tpu_custom_call.1} parent=0
    #allocation2 [shape = 'u8[8192]{0}', space=vmem, size = 0x2000, scoped, tag = 'input window, operand 1, single buffered']
    #allocation3 [shape = 's32[1]{0}', space=sflag, size = 0x4, scoped, tag = 'scoped memory for tpu_custom_call.1']
    #allocation4 [shape = 's32[1]{0}', space=sflag, size = 0x4, scoped, tag = 'scoped memory for tpu_custom_call.1']
    #allocation5 [shape = 'u8[4096]{0}', space=vmem, size = 0x1000, scoped, tag = 'output window, operand 0, single buffered']
    %12 = vsyncpa [#allocation3], 0
    %13 = vsyncpa [#allocation4], 0
    // Predicated region
    $region2: #{tpu_custom_call.1} parent=1 // pred_check
      _
    $region3: #{tpu_custom_call.1} parent=1 // pred_check_branch
      %15 = sbr.rel (0) target = $region5
    $region4: #{tpu_custom_call.1} parent=1 // pred_region
      _
    $region5: #{tpu_custom_call.1} parent=1 // pred_fallthru
      _
    // Predicated region
    $region6: #{tpu_custom_call.1} parent=1 // pred_check
      _
    $region7: #{tpu_custom_call.1} parent=1 // pred_check_branch
      %17 = sbr.rel (0) target = $region9
    $region8: #{tpu_custom_call.1} parent=1 // pred_region
      %19 = vsyncadd [#allocation3], 0
      %s20 = sshll.u32 %s1, 4
      %s21 = int_to_ptr.hbm [resolvable:$true] %s20
      %s22 = sshll.u32 [#allocation2], 4
      %s23 = int_to_ptr.vmem [resolvable:$true] %s22
      %28 = dma.hbm_to_vmem [thread:$0]  %s21, 256, %s23, [#allocation3], 64, 64, 4
    $region9: #{tpu_custom_call.1} parent=1 // pred_fallthru
      _
    // Predicated region
    $region10: #{tpu_custom_call.1} parent=1 // pred_check
      _
    $region11: #{tpu_custom_call.1} parent=1 // pred_check_branch
      %30 = sbr.rel (0) target = $region13
    $region12: #{tpu_custom_call.1} parent=1 // pred_region
      _
    $region13: #{tpu_custom_call.1} parent=1 // pred_fallthru
      _
    // Predicated region
    $region14: #{tpu_custom_call.1} parent=1 // pred_check
      _
    $region15: #{tpu_custom_call.1} parent=1 // pred_check_branch
      %32 = sbr.rel (0) target = $region17
    $region16: #{tpu_custom_call.1} parent=1 // pred_region
      _
    $region17: #{tpu_custom_call.1} parent=1 // pred_fallthru
      _
    // Predicated region
    $region18: #{tpu_custom_call.1} parent=1 // pred_check
      _
    $region19: #{tpu_custom_call.1} parent=1 // pred_check_branch
      %34 = sbr.rel (0) target = $region21
    $region20: #{tpu_custom_call.1} parent=1 // pred_region
      _
    $region21: #{tpu_custom_call.1} parent=1 // pred_fallthru
      _
    // Predicated region
    $region22: #{tpu_custom_call.1} parent=1 // pred_check
      _
    $region23: #{tpu_custom_call.1} parent=1 // pred_check_branch
      %36 = sbr.rel (0) target = $region25
    $region24: #{tpu_custom_call.1} parent=1 // pred_region
      _
    $region25: #{tpu_custom_call.1} parent=1 // pred_fallthru
      _
    // Predicated region
    $region26: #{tpu_custom_call.1} parent=1 // pred_check
      _
    $region27: #{tpu_custom_call.1} parent=1 // pred_check_branch
      %38 = sbr.rel (0) target = $region29
    $region28: #{tpu_custom_call.1} parent=1 // pred_region
      _
    $region29: #{tpu_custom_call.1} parent=1 // pred_fallthru
      _
    // Predicated region
    $region30: #{tpu_custom_call.1} parent=1 // pred_check
      _
    $region31: #{tpu_custom_call.1} parent=1 // pred_check_branch
      %40 = sbr.rel (0) target = $region33
    $region32: #{tpu_custom_call.1} parent=1 // pred_region
      %42 = dma.done [#allocation3], 256
    $region33: #{tpu_custom_call.1} parent=1 // pred_fallthru
      _
    %v44 = vld [vmem:[%s0] sm:$0xff]
    %v45 = vpack.c.bf16 %v44, %v44
    %v46 = vld [vmem:[#allocation2] sm:$0xf]
    %v47 = vld [vmem:[#allocation2 + $0x4] sm:$0xf]
    %v48 = vld [vmem:[#allocation2 + $0x8] sm:$0xf]
    %v49 = vld [vmem:[#allocation2 + $0xc] sm:$0xf]
    %v50 = vld [vmem:[%s2] sm:$0x1]
    %v52 = vperm.slane %v50, 0
    %v58 = vunpack.c.l.b16 %v46
    %v59 = vunpack.c.l.b16 %v47
    %v60 = vunpack.c.l.b16 %v48
    %v61 = vunpack.c.l.b16 %v49
    %v62 = vpack.c.b16 %v59, %v58
    %v63 = vpack.c.b16 %v61, %v60
    %vm66 = vcmask 261120
    %v68 = vsel %vm66, %v45, 0
    %70 = vmatpush.bf16.msra.mxu0 0
    %71 = vmatpush.bf16.msra.mxu0 0
    %72 = vmatpush.bf16.msra.mxu0 0
    %73 = vmatpush.bf16.msra.mxu0 0
    %74 = vmatpush.bf16.msra.mxu0 0
    %75 = vmatpush.bf16.msra.mxu0 0
    %76 = vmatpush.bf16.msra.mxu0 %v63
    %77 = vmatpush.bf16.msra.mxu0 %v62
    %78 = vmatmul.bf16.gmra.mxu0 %v68
    %v79 = vpop.f32.mrf.mxu0
    %v80 = vadd.f32 %v52, %v79
    %v81 = vpop.f32.mrf.mxu0
    %82 = vdwg.mxu0
    %v83 = vmax.f32 %v80, 0.0
    %v84 = vpack.c.bf16 %v83, %v83
    %v85 = vld [vmem:[%s3] sm:$0xf]
    %v86 = vld [vmem:[%s3 + $0x4] sm:$0xf]
    %v87 = vld [vmem:[%s3 + $0x8] sm:$0xf]
    %v88 = vld [vmem:[%s3 + $0xc] sm:$0xf]
    %v89 = vld [vmem:[%s3 + $0x10] sm:$0xf]
    %v90 = vld [vmem:[%s3 + $0x14] sm:$0xf]
    %v91 = vld [vmem:[%s3 + $0x18] sm:$0xf]
    %v92 = vld [vmem:[%s3 + $0x1c] sm:$0xf]
    %v93 = vld [vmem:[%s3 + $0x20] sm:$0xf]
    %v94 = vld [vmem:[%s3 + $0x24] sm:$0xf]
    %v95 = vld [vmem:[%s3 + $0x28] sm:$0xf]
    %v96 = vld [vmem:[%s3 + $0x2c] sm:$0xf]
    %v97 = vld [vmem:[%s3 + $0x30] sm:$0xf]
    %v98 = vld [vmem:[%s3 + $0x34] sm:$0xf]
    %v99 = vld [vmem:[%s3 + $0x38] sm:$0xf]
    %v100 = vld [vmem:[%s3 + $0x3c] sm:$0xf]
    %v101 = vld [vmem:[%s4] sm:$0x1]
    %v103 = vperm.slane %v101, 0
    %v121 = vunpack.c.l.b16 %v85
    %v122 = vunpack.c.l.b16 %v86
    %v123 = vunpack.c.l.b16 %v87
    %v124 = vunpack.c.l.b16 %v88
    %v125 = vunpack.c.l.b16 %v89
    %v126 = vunpack.c.l.b16 %v90
    %v127 = vunpack.c.l.b16 %v91
    %v128 = vunpack.c.l.b16 %v92
    %v129 = vunpack.c.l.b16 %v93
    %v130 = vunpack.c.l.b16 %v94
    %v131 = vunpack.c.l.b16 %v95
    %v132 = vunpack.c.l.b16 %v96
    %v133 = vunpack.c.l.b16 %v97
    %v134 = vunpack.c.l.b16 %v98
    %v135 = vunpack.c.l.b16 %v99
    %v136 = vunpack.c.l.b16 %v100
    %v137 = vpack.c.b16 %v122, %v121
    %v138 = vpack.c.b16 %v124, %v123
    %v139 = vpack.c.b16 %v126, %v125
    %v140 = vpack.c.b16 %v128, %v127
    %v141 = vpack.c.b16 %v130, %v129
    %v142 = vpack.c.b16 %v132, %v131
    %v143 = vpack.c.b16 %v134, %v133
    %v144 = vpack.c.b16 %v136, %v135
    %153 = vmatpush.bf16.msra.mxu0 %v144
    %154 = vmatpush.bf16.msra.mxu0 %v143
    %155 = vmatpush.bf16.msra.mxu0 %v142
    %156 = vmatpush.bf16.msra.mxu0 %v141
    %157 = vmatpush.bf16.msra.mxu0 %v140
    %158 = vmatpush.bf16.msra.mxu0 %v139
    %159 = vmatpush.bf16.msra.mxu0 %v138
    %160 = vmatpush.bf16.msra.mxu0 %v137
    %161 = vmatmul.bf16.gmra.mxu0 %v84
    %v162 = vpop.f32.mrf.mxu0
    %v163 = vadd.f32 %v103, %v162
    %v164 = vpop.f32.mrf.mxu0
    %165 = vdwg.mxu0
    %v166 = vmax.f32 %v163, 0.0
    %v167 = vpack.c.bf16 %v166, %v166
    %v168 = vld [vmem:[%s5] sm:$0xf]
    %v169 = vld [vmem:[%s5 + $0x4] sm:$0xf]
    %v170 = vld [vmem:[%s5 + $0x8] sm:$0xf]
    %v171 = vld [vmem:[%s5 + $0xc] sm:$0xf]
    %v172 = vld [vmem:[%s5 + $0x10] sm:$0xf]
    %v173 = vld [vmem:[%s5 + $0x14] sm:$0xf]
    %v174 = vld [vmem:[%s5 + $0x18] sm:$0xf]
    %v175 = vld [vmem:[%s5 + $0x1c] sm:$0xf]
    %v176 = vld [vmem:[%s5 + $0x20] sm:$0xf]
    %v177 = vld [vmem:[%s5 + $0x24] sm:$0xf]
    %v178 = vld [vmem:[%s5 + $0x28] sm:$0xf]
    %v179 = vld [vmem:[%s5 + $0x2c] sm:$0xf]
    %v180 = vld [vmem:[%s5 + $0x30] sm:$0xf]
    %v181 = vld [vmem:[%s5 + $0x34] sm:$0xf]
    %v182 = vld [vmem:[%s5 + $0x38] sm:$0xf]
    %v183 = vld [vmem:[%s5 + $0x3c] sm:$0xf]
    %v184 = vld [vmem:[%s6] sm:$0x1]
    %v186 = vperm.slane %v184, 0
    %v204 = vunpack.c.l.b16 %v168
    %v205 = vunpack.c.l.b16 %v169
    %v206 = vunpack.c.l.b16 %v170
    %v207 = vunpack.c.l.b16 %v171
    %v208 = vunpack.c.l.b16 %v172
    %v209 = vunpack.c.l.b16 %v173
    %v210 = vunpack.c.l.b16 %v174
    %v211 = vunpack.c.l.b16 %v175
    %v212 = vunpack.c.l.b16 %v176
    %v213 = vunpack.c.l.b16 %v177
    %v214 = vunpack.c.l.b16 %v178
    %v215 = vunpack.c.l.b16 %v179
    %v216 = vunpack.c.l.b16 %v180
    %v217 = vunpack.c.l.b16 %v181
    %v218 = vunpack.c.l.b16 %v182
    %v219 = vunpack.c.l.b16 %v183
    %v220 = vpack.c.b16 %v205, %v204
    %v221 = vpack.c.b16 %v207, %v206
    %v222 = vpack.c.b16 %v209, %v208
    %v223 = vpack.c.b16 %v211, %v210
    %v224 = vpack.c.b16 %v213, %v212
    %v225 = vpack.c.b16 %v215, %v214
    %v226 = vpack.c.b16 %v217, %v216
    %v227 = vpack.c.b16 %v219, %v218
    %236 = vmatpush.bf16.msra.mxu0 %v227
    %237 = vmatpush.bf16.msra.mxu0 %v226
    %238 = vmatpush.bf16.msra.mxu0 %v225
    %239 = vmatpush.bf16.msra.mxu0 %v224
    %240 = vmatpush.bf16.msra.mxu0 %v223
    %241 = vmatpush.bf16.msra.mxu0 %v222
    %242 = vmatpush.bf16.msra.mxu0 %v221
    %243 = vmatpush.bf16.msra.mxu0 %v220
    %244 = vmatmul.bf16.gmra.mxu0 %v167
    %v245 = vpop.f32.mrf.mxu0
    %v246 = vadd.f32 %v186, %v245
    %v247 = vpop.f32.mrf.mxu0
    %248 = vdwg.mxu0
    %vm249 = vcmask 130048
    %250 = vst.msk [vmem:[#allocation5] sm:$0xff] %vm249, %v246
    // Predicated region
    $region34: #{tpu_custom_call.1} parent=1 // pred_check
      _
    $region35: #{tpu_custom_call.1} parent=1 // pred_check_branch
      %252 = sbr.rel (0) target = $region37
    $region36: #{tpu_custom_call.1} parent=1 // pred_region
      %254 = vsyncadd [#allocation4], 0
      %s256 = sshll.u32 [#allocation5], 4
      %s257 = int_to_ptr.vmem [resolvable:$true] %s256
      %s258 = sshll.u32 %s7, 4
      %s259 = int_to_ptr.hbm [resolvable:$true] %s258
      %261 = dma.vmem_to_hbm [thread:$0]  %s257, 128, %s259, [#allocation4]
    $region37: #{tpu_custom_call.1} parent=1 // pred_fallthru
      _
    // Predicated region
    $region38: #{tpu_custom_call.1} parent=1 // pred_check
      _
    $region39: #{tpu_custom_call.1} parent=1 // pred_check_branch
      %263 = sbr.rel (0) target = $region41
    $region40: #{tpu_custom_call.1} parent=1 // pred_region
      %265 = dma.done [#allocation4], 128
    $region41: #{tpu_custom_call.1} parent=1 // pred_fallthru
      _
    %266 = vsyncpa [#allocation3], 1
    %267 = vsyncpa [#allocation4], 1

</llo_original>
